<compile_context>
chip_gen: v7x
topology: tpu7x:2x2x1
jax: 0.10.0
libtpu: 0.0.40
codegen_flags: <defaults>
</compile_context>

<pallas_src>
import jax
import jax.numpy as jnp
from jax import lax
from jax.experimental import pallas as pl
from jax.experimental.pallas import tpu as pltpu

# ----------------------------- problem sizes --------------------------------
B = 2          # batch
C_IN = 4       # dim
C_OUT = 8      # dim_out
H = W = 16     # spatial
T_EMB = 32     # time_emb_dim
EPS = 1e-12    # F.normalize eps

M = B * H            # 32   matmul M dim (one image row per sublane row)
KX = W * C_IN        # 64   lane width of unpadded input activations (x, c_in)
KH = W * C_OUT       # 128  lane width of hidden / output activations (x, c_out)
KC = 3 * KX          # 192  lane width of the dy-im2col conv1 slab


def _silu(x):
    return x * jax.nn.sigmoid(x)


# ------------------------------- the kernel ---------------------------------
def resnet_block_kernel(
    xcol_ref,  # (M, 3*KX)  bf16  dy-im2col input slab (dy-major lanes)
    xin_ref,   # (M, KX)    bf16  unpadded input for the residual 1x1 conv
    w1s_ref,   # (3*KX, KH) bf16  stacked banded conv1 weight (dy folded in)
    w2b_ref,   # (3, KH, KH) bf16 banded conv2 weight, one per dy tap
    wrb_ref,   # (KX, KH)   bf16  banded residual 1x1 conv weight
    ssm_ref,   # (KH, KH)   bf16  block-diag ones (per-pixel channel sum-sq)
    b1_ref,    # (1, KH)    f32   conv1 bias tiled over W
    b2_ref,    # (1, KH)    f32   conv2 bias tiled over W
    br_ref,    # (1, KH)    f32   res_conv bias tiled over W
    m1_ref,    # (M, KH)    f32   g1*sqrt(C)*(scale+1), per-batch rows
    sh_ref,    # (M, KH)    f32   shift, per-batch rows
    m2_ref,    # (1, KH)    f32   g2*sqrt(C)
    mt_ref,    # (M, 1)     f32   0 on first image row (y==0), else 1
    mb_ref,    # (M, 1)     f32   0 on last image row (y==H-1), else 1
    o_ref,     # (M, KH)    f32
):
    f32, bf16 = jnp.float32, jnp.bfloat16

    # ---- block1: whole 3x3 conv = ONE banded MXU matmul ----------------------
    acc1 = jnp.dot(xcol_ref[...], w1s_ref[...], preferred_element_type=f32)
    acc1 = acc1 + b1_ref[...]

    # RMSNorm over channels (per pixel): sum-of-squares via block-diag ones
    # matmul (reduce + broadcast in a single MXU op), rsqrt on the EUP.
    ss1 = jnp.dot((acc1 * acc1).astype(bf16), ssm_ref[...],
                  preferred_element_type=f32)
    h1 = acc1 * lax.rsqrt(jnp.maximum(ss1, EPS * EPS))
    h1 = _silu(h1 * m1_ref[...] + sh_ref[...])

    # ---- block2: 3 banded matmuls; dy via output-side sublane rolls + masks --
    h1b = h1.astype(bf16)
    acc2 = jnp.dot(h1b, w2b_ref[1], preferred_element_type=f32) + b2_ref[...]
    y0 = jnp.dot(h1b, w2b_ref[0], preferred_element_type=f32)
    acc2 = acc2 + pltpu.roll(y0, shift=1, axis=0) * mt_ref[...]
    y2 = jnp.dot(h1b, w2b_ref[2], preferred_element_type=f32)
    acc2 = acc2 + pltpu.roll(y2, shift=M - 1, axis=0) * mb_ref[...]

    ss2 = jnp.dot((acc2 * acc2).astype(bf16), ssm_ref[...],
                  preferred_element_type=f32)
    h2 = _silu(acc2 * lax.rsqrt(jnp.maximum(ss2, EPS * EPS)) * m2_ref[...])

    # ---- residual 1x1 conv (dim != dim_out) + final lane-dense store ---------
    res = jnp.dot(xin_ref[...], wrb_ref[...], preferred_element_type=f32)
    o_ref[...] = h2 + res + br_ref[...]


# --------------------- wrapper-side weight/layout plumbing -------------------
def _banded_conv_weight(w_hwio, c_in):
    """(3,3,c_in,C_OUT) HWIO -> (3, W*c_in, W*C_OUT), one banded matrix per dy.

    band[dy][xin*c_in + ci, xo*C_OUT + co] = w[dy, dx, ci, co] with
    xin = xo + dx - 1; out-of-range xin has no entry (== zero padding along W),
    so the MXU matmul performs the full dx / input-channel reduction.
    """
    bands = []
    for dy in range(3):
        acc = jnp.zeros((W, c_in, W, C_OUT), jnp.float32)
        for dx in range(3):
            eye = jnp.eye(W, W, k=1 - dx, dtype=jnp.float32)
            acc = acc + jnp.einsum("pq,io->piqo", eye, w_hwio[dy, dx])
        bands.append(acc.reshape(W * c_in, W * C_OUT))
    return jnp.stack(bands)


def resnet_block(x_nhwc, time_emb, params):
    """x_nhwc: (B, H, W, C_IN) f32, time_emb: (B, T_EMB) f32 -> (B, H, W, C_OUT)."""
    (w1, b1, g1, w2, b2, g2, wr, br, mw, mbias) = params
    f32, bf16 = jnp.float32, jnp.bfloat16

    # activations: dy-im2col slab + separate unpadded residual input (bf16 at MXU)
    x2d = x_nhwc.reshape(B, H, W * C_IN)
    xpad = jnp.pad(x2d, ((0, 0), (1, 1), (0, 0)))
    xcol = jnp.concatenate([xpad[:, dy:dy + H, :] for dy in range(3)], axis=-1)
    xcol = xcol.reshape(M, KC).astype(bf16)
    xin = x2d.reshape(M, KX).astype(bf16)

    # banded weights (bf16 at the MXU; f32 accumulation inside the kernel)
    w1s = _banded_conv_weight(w1, C_IN).reshape(KC, KH).astype(bf16)    # (192,128)
    w2b = _banded_conv_weight(w2, C_OUT).astype(bf16)                   # (3,128,128)
    wrb = jnp.einsum("pq,io->piqo", jnp.eye(W, dtype=f32), wr
                     ).reshape(KX, KH).astype(bf16)                     # (64,128)
    ssm = jnp.kron(jnp.eye(W, dtype=f32),
                   jnp.ones((C_OUT, C_OUT), f32)).astype(bf16)          # (128,128)

    # time MLP hoisted out of the kernel; fold g*sqrt(C) and (scale+1).
    emb = _silu(time_emb) @ mw + mbias                                  # (B, 2*C_OUT)
    scale, shift = emb[:, :C_OUT], emb[:, C_OUT:]
    sqrt_c = jnp.sqrt(jnp.float32(C_OUT))
    m1 = jnp.repeat(jnp.tile(g1 * sqrt_c * (scale + 1.0), (1, W)), H, axis=0)
    sh = jnp.repeat(jnp.tile(shift, (1, W)), H, axis=0)                 # (M, 128)
    m2 = jnp.tile(g2 * sqrt_c, (1, W))                                  # (1, 128)
    b1r = jnp.tile(b1, (1, W))
    b2r = jnp.tile(b2, (1, W))
    brr = jnp.tile(br, (1, W))

    # (M,1) boundary masks for conv2's rolled dy taps (image / batch edges)
    ycoord = jnp.tile(jnp.arange(H), B)
    mask_t = (ycoord != 0).astype(f32)[:, None]                         # (M, 1)
    mask_b = (ycoord != H - 1).astype(f32)[:, None]                     # (M, 1)

    inputs = (xcol, xin, w1s, w2b, wrb, ssm,
              b1r, b2r, brr, m1, sh, m2, mask_t, mask_b)

    def fullspec(shape):
        n = len(shape)
        return pl.BlockSpec(shape, lambda i, _n=n: (0,) * _n)

    grid_spec = pltpu.PrefetchScalarGridSpec(
        num_scalar_prefetch=0,
        grid=(1,),                      # batch folded into M = B*H rows
        in_specs=[fullspec(a.shape) for a in inputs],
        out_specs=pl.BlockSpec((M, KH), lambda i: (0, 0)),
    )

    out2d = pl.pallas_call(
        resnet_block_kernel,
        out_shape=jax.ShapeDtypeStruct((M, KH), jnp.float32),
        grid_spec=grid_spec,
        compiler_params=pltpu.CompilerParams(
            dimension_semantics=("arbitrary",)),
    )(*inputs)

    # (B*H, W*C_OUT) -> NHWC
    return out2d.reshape(B, H, W, C_OUT)


# ------------------------- pure-JAX reference (check) ------------------------
def resnet_block_ref(x, te, params):
    (w1, b1, g1, w2, b2, g2, wr, br, mw, mbias) = params

    def conv3(x, w, b):
        y = lax.conv_general_dilated(
            x, w, window_strides=(1, 1), padding="SAME",
            dimension_numbers=("NHWC", "HWIO", "NHWC"))
        return y + b[0]

    def rmsn(x, g):
        n = jnp.sqrt(jnp.sum(x * x, axis=-1, keepdims=True))
        return x / jnp.maximum(n, EPS) * g[0] * jnp.sqrt(jnp.float32(x.shape[-1]))

    emb = _silu(te) @ mw + mbias[0]
    scale, shift = emb[:, :C_OUT], emb[:, C_OUT:]
    h = conv3(x, w1, b1)
    h = rmsn(h, g1)
    h = h * (scale[:, None, None, :] + 1.0) + shift[:, None, None, :]
    h = _silu(h)
    h = conv3(h, w2, b2)
    h = rmsn(h, g2)
    h = _silu(h)
    res = jnp.einsum("bhwi,io->bhwo", x, wr) + br[0]
    return h + res


# ----------------------------------- main ------------------------------------
if __name__ == "__main__":
    key = jax.random.PRNGKey(0)
    keys = jax.random.split(key, 12)

    # deterministic synthetic parameters (shapes follow the module __init__;
    # conv weights stored HWIO == PyTorch OIHW transposed)
    w1 = 0.1 * jax.random.normal(keys[0], (3, 3, C_IN, C_OUT), jnp.float32)
    b1 = 0.1 * jax.random.normal(keys[1], (1, C_OUT), jnp.float32)
    g1 = 1.0 + 0.1 * jax.random.normal(keys[2], (1, C_OUT), jnp.float32)
    w2 = 0.1 * jax.random.normal(keys[3], (3, 3, C_OUT, C_OUT), jnp.float32)
    b2 = 0.1 * jax.random.normal(keys[4], (1, C_OUT), jnp.float32)
    g2 = 1.0 + 0.1 * jax.random.normal(keys[5], (1, C_OUT), jnp.float32)
    wr = 0.1 * jax.random.normal(keys[6], (C_IN, C_OUT), jnp.float32)
    br = 0.1 * jax.random.normal(keys[7], (1, C_OUT), jnp.float32)
    mw = 0.1 * jax.random.normal(keys[8], (T_EMB, 2 * C_OUT), jnp.float32)
    mbias = 0.1 * jax.random.normal(keys[9], (1, 2 * C_OUT), jnp.float32)
    params = (w1, b1, g1, w2, b2, g2, wr, br, mw, mbias)

    # inputs (NHWC; the equivalent PyTorch NCHW input is x.transpose(0, 3, 1, 2))
    x = jax.random.normal(keys[10], (B, H, W, C_IN), jnp.float32)
    te = jax.random.normal(keys[11], (B, T_EMB), jnp.float32)

    fwd = jax.jit(lambda xx, tt: resnet_block(xx, tt, params))
    out = jax.block_until_ready(fwd(x, te))
    ref = jax.block_until_ready(resnet_block_ref(x, te, params))

    assert out.shape == (B, H, W, C_OUT)
    # bf16 MXU operands (f32 accumulation) per the perf review -> validate at a
    # bf16-appropriate tolerance against the pure-f32 reference.
    err = jnp.max(jnp.abs(out - ref))
    assert jnp.allclose(out, ref, atol=5e-2, rtol=5e-2), f"max err {err}"
    print("KERNEL_OK")
</pallas_src>

<mosaic_0001>
module attributes {stable_mosaic.version = 11 : i64} {
  func.func @resnet_block_kernel(%arg0: i32, %arg1: memref<32x192xbf16, #tpu.memory_space<vmem>>, %arg2: memref<32x64xbf16, #tpu.memory_space<vmem>>, %arg3: memref<192x128xbf16, #tpu.memory_space<vmem>>, %arg4: memref<3x128x128xbf16, #tpu.memory_space<vmem>>, %arg5: memref<64x128xbf16, #tpu.memory_space<vmem>>, %arg6: memref<128x128xbf16, #tpu.memory_space<vmem>>, %arg7: memref<1x128xf32, #tpu.memory_space<vmem>>, %arg8: memref<1x128xf32, #tpu.memory_space<vmem>>, %arg9: memref<1x128xf32, #tpu.memory_space<vmem>>, %arg10: memref<32x128xf32, #tpu.memory_space<vmem>>, %arg11: memref<32x128xf32, #tpu.memory_space<vmem>>, %arg12: memref<1x128xf32, #tpu.memory_space<vmem>>, %arg13: memref<32x1xf32, #tpu.memory_space<vmem>>, %arg14: memref<32x1xf32, #tpu.memory_space<vmem>>, %arg15: memref<32x128xf32, #tpu.memory_space<vmem>>) attributes {dimension_semantics = [#tpu.dimension_semantics<arbitrary>], iteration_bounds = array<i64: 1>, scalar_prefetch = 0 : i64, scratch_operands = 0 : i64, tpu.core_type = #tpu.core_type<tc>, window_params = [{pipeline_mode = #tpu.pipeline_mode<synchronous>, transform_indices = @transform_0, window_bounds = array<i64: 32, 192>}, {pipeline_mode = #tpu.pipeline_mode<synchronous>, transform_indices = @transform_1, window_bounds = array<i64: 32, 64>}, {pipeline_mode = #tpu.pipeline_mode<synchronous>, transform_indices = @transform_2, window_bounds = array<i64: 192, 128>}, {pipeline_mode = #tpu.pipeline_mode<synchronous>, transform_indices = @transform_3, window_bounds = array<i64: 3, 128, 128>}, {pipeline_mode = #tpu.pipeline_mode<synchronous>, transform_indices = @transform_4, window_bounds = array<i64: 64, 128>}, {pipeline_mode = #tpu.pipeline_mode<synchronous>, transform_indices = @transform_5, window_bounds = array<i64: 128, 128>}, {pipeline_mode = #tpu.pipeline_mode<synchronous>, transform_indices = @transform_6, window_bounds = array<i64: 1, 128>}, {pipeline_mode = #tpu.pipeline_mode<synchronous>, transform_indices = @transform_7, window_bounds = array<i64: 1, 128>}, {pipeline_mode = #tpu.pipeline_mode<synchronous>, transform_indices = @transform_8, window_bounds = array<i64: 1, 128>}, {pipeline_mode = #tpu.pipeline_mode<synchronous>, transform_indices = @transform_9, window_bounds = array<i64: 32, 128>}, {pipeline_mode = #tpu.pipeline_mode<synchronous>, transform_indices = @transform_10, window_bounds = array<i64: 32, 128>}, {pipeline_mode = #tpu.pipeline_mode<synchronous>, transform_indices = @transform_11, window_bounds = array<i64: 1, 128>}, {pipeline_mode = #tpu.pipeline_mode<synchronous>, transform_indices = @transform_12, window_bounds = array<i64: 32, 1>}, {pipeline_mode = #tpu.pipeline_mode<synchronous>, transform_indices = @transform_13, window_bounds = array<i64: 32, 1>}, {pipeline_mode = #tpu.pipeline_mode<synchronous>, transform_indices = @transform_14, window_bounds = array<i64: 32, 128>}]} {
    %c0 = arith.constant 0 : index
    %c0_0 = arith.constant 0 : index
    %0 = vector.load %arg1[%c0, %c0_0] : memref<32x192xbf16, #tpu.memory_space<vmem>>, vector<32x192xbf16>
    %c0_1 = arith.constant 0 : index
    %c0_2 = arith.constant 0 : index
    %1 = vector.load %arg3[%c0_1, %c0_2] : memref<192x128xbf16, #tpu.memory_space<vmem>>, vector<192x128xbf16>
    %cst = arith.constant dense<0.000000e+00> : vector<32x128xf32>
    %2 = tpu.matmul %0, %1, %cst {dimension_numbers = #tpu.dot_dimension_numbers<[1], [0], [0], [1], [0, 0, 1, 1], [], []>} : vector<32x192xbf16>, vector<192x128xbf16>, vector<32x128xf32> -> vector<32x128xf32>
    %c0_3 = arith.constant 0 : index
    %c0_4 = arith.constant 0 : index
    %3 = vector.load %arg7[%c0_3, %c0_4] : memref<1x128xf32, #tpu.memory_space<vmem>>, vector<1x128xf32>
    %4 = vector.broadcast %3 : vector<1x128xf32> to vector<32x128xf32>
    %5 = arith.addf %2, %4 : vector<32x128xf32>
    %6 = arith.mulf %5, %5 : vector<32x128xf32>
    %7 = arith.truncf %6 : vector<32x128xf32> to vector<32x128xbf16>
    %c0_5 = arith.constant 0 : index
    %c0_6 = arith.constant 0 : index
    %8 = vector.load %arg6[%c0_5, %c0_6] : memref<128x128xbf16, #tpu.memory_space<vmem>>, vector<128x128xbf16>
    %cst_7 = arith.constant dense<0.000000e+00> : vector<32x128xf32>
    %9 = tpu.matmul %7, %8, %cst_7 {dimension_numbers = #tpu.dot_dimension_numbers<[1], [0], [0], [1], [0, 0, 1, 1], [], []>} : vector<32x128xbf16>, vector<128x128xbf16>, vector<32x128xf32> -> vector<32x128xf32>
    %cst_8 = arith.constant 1.000000e-24 : f32
    %10 = vector.broadcast %cst_8 : f32 to vector<32x128xf32>
    %11 = arith.maximumf %9, %10 : vector<32x128xf32>
    %12 = math.rsqrt %11 : vector<32x128xf32>
    %13 = arith.mulf %5, %12 : vector<32x128xf32>
    %c0_9 = arith.constant 0 : index
    %c0_10 = arith.constant 0 : index
    %14 = vector.load %arg10[%c0_9, %c0_10] : memref<32x128xf32, #tpu.memory_space<vmem>>, vector<32x128xf32>
    %15 = arith.mulf %13, %14 : vector<32x128xf32>
    %c0_11 = arith.constant 0 : index
    %c0_12 = arith.constant 0 : index
    %16 = vector.load %arg11[%c0_11, %c0_12] : memref<32x128xf32, #tpu.memory_space<vmem>>, vector<32x128xf32>
    %17 = arith.addf %15, %16 : vector<32x128xf32>
    %18 = arith.negf %17 : vector<32x128xf32>
    %19 = math.exp %18 : vector<32x128xf32>
    %cst_13 = arith.constant 1.000000e+00 : f32
    %20 = vector.broadcast %cst_13 : f32 to vector<32x128xf32>
    %21 = arith.addf %20, %19 : vector<32x128xf32>
    %22 = arith.divf %20, %21 : vector<32x128xf32>
    %23 = arith.mulf %17, %22 : vector<32x128xf32>
    %24 = arith.truncf %23 : vector<32x128xf32> to vector<32x128xbf16>
    %c1 = arith.constant 1 : index
    %c0_14 = arith.constant 0 : index
    %c0_15 = arith.constant 0 : index
    %25 = vector.load %arg4[%c1, %c0_14, %c0_15] : memref<3x128x128xbf16, #tpu.memory_space<vmem>>, vector<1x128x128xbf16>
    %26 = vector.shape_cast %25 : vector<1x128x128xbf16> to vector<128x128xbf16>
    %cst_16 = arith.constant dense<0.000000e+00> : vector<32x128xf32>
    %27 = tpu.matmul %24, %26, %cst_16 {dimension_numbers = #tpu.dot_dimension_numbers<[1], [0], [0], [1], [0, 0, 1, 1], [], []>} : vector<32x128xbf16>, vector<128x128xbf16>, vector<32x128xf32> -> vector<32x128xf32>
    %c0_17 = arith.constant 0 : index
    %c0_18 = arith.constant 0 : index
    %28 = vector.load %arg8[%c0_17, %c0_18] : memref<1x128xf32, #tpu.memory_space<vmem>>, vector<1x128xf32>
    %29 = vector.broadcast %28 : vector<1x128xf32> to vector<32x128xf32>
    %30 = arith.addf %27, %29 : vector<32x128xf32>
    %c0_19 = arith.constant 0 : index
    %c0_20 = arith.constant 0 : index
    %c0_21 = arith.constant 0 : index
    %31 = vector.load %arg4[%c0_19, %c0_20, %c0_21] : memref<3x128x128xbf16, #tpu.memory_space<vmem>>, vector<1x128x128xbf16>
    %32 = vector.shape_cast %31 : vector<1x128x128xbf16> to vector<128x128xbf16>
    %cst_22 = arith.constant dense<0.000000e+00> : vector<32x128xf32>
    %33 = tpu.matmul %24, %32, %cst_22 {dimension_numbers = #tpu.dot_dimension_numbers<[1], [0], [0], [1], [0, 0, 1, 1], [], []>} : vector<32x128xbf16>, vector<128x128xbf16>, vector<32x128xf32> -> vector<32x128xf32>
    %c1_i32 = arith.constant 1 : i32
    %34 = tpu.dynamic_rotate %33 by %c1_i32 dim 0 : vector<32x128xf32>, i32 -> vector<32x128xf32>
    %c0_23 = arith.constant 0 : index
    %c0_24 = arith.constant 0 : index
    %35 = vector.load %arg13[%c0_23, %c0_24] : memref<32x1xf32, #tpu.memory_space<vmem>>, vector<32x1xf32>
    %36 = vector.broadcast %35 : vector<32x1xf32> to vector<32x128xf32>
    %37 = arith.mulf %34, %36 : vector<32x128xf32>
    %38 = arith.addf %30, %37 : vector<32x128xf32>
    %c2 = arith.constant 2 : index
    %c0_25 = arith.constant 0 : index
    %c0_26 = arith.constant 0 : index
    %39 = vector.load %arg4[%c2, %c0_25, %c0_26] : memref<3x128x128xbf16, #tpu.memory_space<vmem>>, vector<1x128x128xbf16>
    %40 = vector.shape_cast %39 : vector<1x128x128xbf16> to vector<128x128xbf16>
    %cst_27 = arith.constant dense<0.000000e+00> : vector<32x128xf32>
    %41 = tpu.matmul %24, %40, %cst_27 {dimension_numbers = #tpu.dot_dimension_numbers<[1], [0], [0], [1], [0, 0, 1, 1], [], []>} : vector<32x128xbf16>, vector<128x128xbf16>, vector<32x128xf32> -> vector<32x128xf32>
    %c31_i32 = arith.constant 31 : i32
    %42 = tpu.dynamic_rotate %41 by %c31_i32 dim 0 : vector<32x128xf32>, i32 -> vector<32x128xf32>
    %c0_28 = arith.constant 0 : index
    %c0_29 = arith.constant 0 : index
    %43 = vector.load %arg14[%c0_28, %c0_29] : memref<32x1xf32, #tpu.memory_space<vmem>>, vector<32x1xf32>
    %44 = vector.broadcast %43 : vector<32x1xf32> to vector<32x128xf32>
    %45 = arith.mulf %42, %44 : vector<32x128xf32>
    %46 = arith.addf %38, %45 : vector<32x128xf32>
    %47 = arith.mulf %46, %46 : vector<32x128xf32>
    %48 = arith.truncf %47 : vector<32x128xf32> to vector<32x128xbf16>
    %c0_30 = arith.constant 0 : index
    %c0_31 = arith.constant 0 : index
    %49 = vector.load %arg6[%c0_30, %c0_31] : memref<128x128xbf16, #tpu.memory_space<vmem>>, vector<128x128xbf16>
    %cst_32 = arith.constant dense<0.000000e+00> : vector<32x128xf32>
    %50 = tpu.matmul %48, %49, %cst_32 {dimension_numbers = #tpu.dot_dimension_numbers<[1], [0], [0], [1], [0, 0, 1, 1], [], []>} : vector<32x128xbf16>, vector<128x128xbf16>, vector<32x128xf32> -> vector<32x128xf32>
    %cst_33 = arith.constant 1.000000e-24 : f32
    %51 = vector.broadcast %cst_33 : f32 to vector<32x128xf32>
    %52 = arith.maximumf %50, %51 : vector<32x128xf32>
    %53 = math.rsqrt %52 : vector<32x128xf32>
    %54 = arith.mulf %46, %53 : vector<32x128xf32>
    %c0_34 = arith.constant 0 : index
    %c0_35 = arith.constant 0 : index
    %55 = vector.load %arg12[%c0_34, %c0_35] : memref<1x128xf32, #tpu.memory_space<vmem>>, vector<1x128xf32>
    %56 = vector.broadcast %55 : vector<1x128xf32> to vector<32x128xf32>
    %57 = arith.mulf %54, %56 : vector<32x128xf32>
    %58 = arith.negf %57 : vector<32x128xf32>
    %59 = math.exp %58 : vector<32x128xf32>
    %cst_36 = arith.constant 1.000000e+00 : f32
    %60 = vector.broadcast %cst_36 : f32 to vector<32x128xf32>
    %61 = arith.addf %60, %59 : vector<32x128xf32>
    %62 = arith.divf %60, %61 : vector<32x128xf32>
    %63 = arith.mulf %57, %62 : vector<32x128xf32>
    %c0_37 = arith.constant 0 : index
    %c0_38 = arith.constant 0 : index
    %64 = vector.load %arg2[%c0_37, %c0_38] : memref<32x64xbf16, #tpu.memory_space<vmem>>, vector<32x64xbf16>
    %c0_39 = arith.constant 0 : index
    %c0_40 = arith.constant 0 : index
    %65 = vector.load %arg5[%c0_39, %c0_40] : memref<64x128xbf16, #tpu.memory_space<vmem>>, vector<64x128xbf16>
    %cst_41 = arith.constant dense<0.000000e+00> : vector<32x128xf32>
    %66 = tpu.matmul %64, %65, %cst_41 {dimension_numbers = #tpu.dot_dimension_numbers<[1], [0], [0], [1], [0, 0, 1, 1], [], []>} : vector<32x64xbf16>, vector<64x128xbf16>, vector<32x128xf32> -> vector<32x128xf32>
    %67 = arith.addf %63, %66 : vector<32x128xf32>
    %c0_42 = arith.constant 0 : index
    %c0_43 = arith.constant 0 : index
    %68 = vector.load %arg9[%c0_42, %c0_43] : memref<1x128xf32, #tpu.memory_space<vmem>>, vector<1x128xf32>
    %69 = vector.broadcast %68 : vector<1x128xf32> to vector<32x128xf32>
    %70 = arith.addf %67, %69 : vector<32x128xf32>
    %c0_44 = arith.constant 0 : index
    %c0_45 = arith.constant 0 : index
    %71 = vector.load %arg15[%c0_44, %c0_45] : memref<32x128xf32, #tpu.memory_space<vmem>>, vector<32x128xf32>
    tpu.vector_store %arg15[%c0_44, %c0_45], %70 {strides = array<i32>} : memref<32x128xf32, #tpu.memory_space<vmem>>, vector<32x128xf32>,
    return
  }
  func.func @transform_0(%arg0: i32) -> (i32, i32) {
    %c0_i32 = arith.constant 0 : i32
    %c0_i32_0 = arith.constant 0 : i32
    %c0_i32_1 = arith.constant 0 : i32
    return %c0_i32, %c0_i32_0 : i32, i32
  }
  func.func @transform_1(%arg0: i32) -> (i32, i32) {
    %c0_i32 = arith.constant 0 : i32
    %c0_i32_0 = arith.constant 0 : i32
    %c0_i32_1 = arith.constant 0 : i32
    return %c0_i32, %c0_i32_0 : i32, i32
  }
  func.func @transform_2(%arg0: i32) -> (i32, i32) {
    %c0_i32 = arith.constant 0 : i32
    %c0_i32_0 = arith.constant 0 : i32
    %c0_i32_1 = arith.constant 0 : i32
    return %c0_i32, %c0_i32_0 : i32, i32
  }
  func.func @transform_3(%arg0: i32) -> (i32, i32, i32) {
    %c0_i32 = arith.constant 0 : i32
    %c0_i32_0 = arith.constant 0 : i32
    %c0_i32_1 = arith.constant 0 : i32
    %c0_i32_2 = arith.constant 0 : i32
    return %c0_i32, %c0_i32_0, %c0_i32_1 : i32, i32, i32
  }
  func.func @transform_4(%arg0: i32) -> (i32, i32) {
    %c0_i32 = arith.constant 0 : i32
    %c0_i32_0 = arith.constant 0 : i32
    %c0_i32_1 = arith.constant 0 : i32
    return %c0_i32, %c0_i32_0 : i32, i32
  }
  func.func @transform_5(%arg0: i32) -> (i32, i32) {
    %c0_i32 = arith.constant 0 : i32
    %c0_i32_0 = arith.constant 0 : i32
    %c0_i32_1 = arith.constant 0 : i32
    return %c0_i32, %c0_i32_0 : i32, i32
  }
  func.func @transform_6(%arg0: i32) -> (i32, i32) {
    %c0_i32 = arith.constant 0 : i32
    %c0_i32_0 = arith.constant 0 : i32
    %c0_i32_1 = arith.constant 0 : i32
    return %c0_i32, %c0_i32_0 : i32, i32
  }
  func.func @transform_7(%arg0: i32) -> (i32, i32) {
    %c0_i32 = arith.constant 0 : i32
    %c0_i32_0 = arith.constant 0 : i32
    %c0_i32_1 = arith.constant 0 : i32
    return %c0_i32, %c0_i32_0 : i32, i32
  }
  func.func @transform_8(%arg0: i32) -> (i32, i32) {
    %c0_i32 = arith.constant 0 : i32
    %c0_i32_0 = arith.constant 0 : i32
    %c0_i32_1 = arith.constant 0 : i32
    return %c0_i32, %c0_i32_0 : i32, i32
  }
  func.func @transform_9(%arg0: i32) -> (i32, i32) {
    %c0_i32 = arith.constant 0 : i32
    %c0_i32_0 = arith.constant 0 : i32
    %c0_i32_1 = arith.constant 0 : i32
    return %c0_i32, %c0_i32_0 : i32, i32
  }
  func.func @transform_10(%arg0: i32) -> (i32, i32) {
    %c0_i32 = arith.constant 0 : i32
    %c0_i32_0 = arith.constant 0 : i32
    %c0_i32_1 = arith.constant 0 : i32
    return %c0_i32, %c0_i32_0 : i32, i32
  }
  func.func @transform_11(%arg0: i32) -> (i32, i32) {
    %c0_i32 = arith.constant 0 : i32
    %c0_i32_0 = arith.constant 0 : i32
    %c0_i32_1 = arith.constant 0 : i32
    return %c0_i32, %c0_i32_0 : i32, i32
  }
  func.func @transform_12(%arg0: i32) -> (i32, i32) {
    %c0_i32 = arith.constant 0 : i32
    %c0_i32_0 = arith.constant 0 : i32
    %c0_i32_1 = arith.constant 0 : i32
    return %c0_i32, %c0_i32_0 : i32, i32
  }
  func.func @transform_13(%arg0: i32) -> (i32, i32) {
    %c0_i32 = arith.constant 0 : i32
    %c0_i32_0 = arith.constant 0 : i32
    %c0_i32_1 = arith.constant 0 : i32
    return %c0_i32, %c0_i32_0 : i32, i32
  }
  func.func @transform_14(%arg0: i32) -> (i32, i32) {
    %c0_i32 = arith.constant 0 : i32
    %c0_i32_0 = arith.constant 0 : i32
    %c0_i32_1 = arith.constant 0 : i32
    return %c0_i32, %c0_i32_0 : i32, i32
  }
}

</mosaic_0001>

<llo_original>
// kernel: tile.40
$region0: #{tile.40}
  %s0 = inlined_call_operand.vmem [shape: f32[2,16,8], index: 0, kind: input, shape index: {}]
  %s1 = inlined_call_operand.vmem [shape: f32[2,128], index: 1, kind: output, shape index: {}]
  $region1: #{tile.40} parent=0
    #allocation0 [shape = 'u8[4096]{0}', space=vmem, size = 0x1000, scoped, tag = 'scoped mem for output reshape']
    %s2 = smov 3
    %v3 = vld [vmem:[%s0] ss:$16 sm:%s2]
    %vm4 = vcmask 64512
    %5 = vst.msk [vmem:[#allocation0] sm:$0x3] %vm4, %v3
    %s6 = scalar_lea.vmem %s0, 15
    %s7 = smov 3
    %v8 = vld [vmem:[%s6] ss:$16 sm:%s7]
    %9 = vrot.lane.b32.xlu0 %v8, 120
    %v10 = vpop.permute.xlu0 %9
    %vm11 = vcmask 1048512
    %12 = vst.msk [vmem:[#allocation0] sm:$0x3] %vm11, %v10
    %s13 = scalar_lea.vmem %s0, 14
    %s14 = smov 3
    %v15 = vld [vmem:[%s13] ss:$16 sm:%s14]
    %16 = vrot.lane.b32.xlu0 %v15, 112
    %v17 = vpop.permute.xlu0 %16
    %vm18 = vcmask 982912
    %19 = vst.msk [vmem:[#allocation0] sm:$0x3] %vm18, %v17
    %s20 = scalar_lea.vmem %s0, 13
    %s21 = smov 3
    %v22 = vld [vmem:[%s20] ss:$16 sm:%s21]
    %23 = vrot.lane.b32.xlu0 %v22, 104
    %v24 = vpop.permute.xlu0 %23
    %vm25 = vcmask 917312
    %26 = vst.msk [vmem:[#allocation0] sm:$0x3] %vm25, %v24
    %s27 = scalar_lea.vmem %s0, 12
    %s28 = smov 3
    %v29 = vld [vmem:[%s27] ss:$16 sm:%s28]
    %30 = vrot.lane.b32.xlu0 %v29, 96
    %v31 = vpop.permute.xlu0 %30
    %vm32 = vcmask 851712
    %33 = vst.msk [vmem:[#allocation0] sm:$0x3] %vm32, %v31
    %s34 = scalar_lea.vmem %s0, 11
    %s35 = smov 3
    %v36 = vld [vmem:[%s34] ss:$16 sm:%s35]
    %37 = vrot.lane.b32.xlu0 %v36, 88
    %v38 = vpop.permute.xlu0 %37
    %vm39 = vcmask 786112
    %40 = vst.msk [vmem:[#allocation0] sm:$0x3] %vm39, %v38
    %s41 = scalar_lea.vmem %s0, 10
    %s42 = smov 3
    %v43 = vld [vmem:[%s41] ss:$16 sm:%s42]
    %44 = vrot.lane.b32.xlu0 %v43, 80
    %v45 = vpop.permute.xlu0 %44
    %vm46 = vcmask 720512
    %47 = vst.msk [vmem:[#allocation0] sm:$0x3] %vm46, %v45
    %s48 = scalar_lea.vmem %s0, 9
    %s49 = smov 3
    %v50 = vld [vmem:[%s48] ss:$16 sm:%s49]
    %51 = vrot.lane.b32.xlu0 %v50, 72
    %v52 = vpop.permute.xlu0 %51
    %vm53 = vcmask 654912
    %54 = vst.msk [vmem:[#allocation0] sm:$0x3] %vm53, %v52
    %s55 = scalar_lea.vmem %s0, 8
    %s56 = smov 3
    %v57 = vld [vmem:[%s55] ss:$16 sm:%s56]
    %58 = vrot.lane.b32.xlu0 %v57, 64
    %v59 = vpop.permute.xlu0 %58
    %vm60 = vcmask 589312
    %61 = vst.msk [vmem:[#allocation0] sm:$0x3] %vm60, %v59
    %s62 = scalar_lea.vmem %s0, 7
    %s63 = smov 3
    %v64 = vld [vmem:[%s62] ss:$16 sm:%s63]
    %65 = vrot.lane.b32.xlu0 %v64, 56
    %v66 = vpop.permute.xlu0 %65
    %vm67 = vcmask 523712
    %68 = vst.msk [vmem:[#allocation0] sm:$0x3] %vm67, %v66
    %s69 = scalar_lea.vmem %s0, 6
    %s70 = smov 3
    %v71 = vld [vmem:[%s69] ss:$16 sm:%s70]
    %72 = vrot.lane.b32.xlu0 %v71, 48
    %v73 = vpop.permute.xlu0 %72
    %vm74 = vcmask 458112
    %75 = vst.msk [vmem:[#allocation0] sm:$0x3] %vm74, %v73
    %s76 = scalar_lea.vmem %s0, 5
    %s77 = smov 3
    %v78 = vld [vmem:[%s76] ss:$16 sm:%s77]
    %79 = vrot.lane.b32.xlu0 %v78, 40
    %v80 = vpop.permute.xlu0 %79
    %vm81 = vcmask 392512
    %82 = vst.msk [vmem:[#allocation0] sm:$0x3] %vm81, %v80
    %s83 = scalar_lea.vmem %s0, 4
    %s84 = smov 3
    %v85 = vld [vmem:[%s83] ss:$16 sm:%s84]
    %86 = vrot.lane.b32.xlu0 %v85, 32
    %v87 = vpop.permute.xlu0 %86
    %vm88 = vcmask 326912
    %89 = vst.msk [vmem:[#allocation0] sm:$0x3] %vm88, %v87
    %s90 = scalar_lea.vmem %s0, 3
    %s91 = smov 3
    %v92 = vld [vmem:[%s90] ss:$16 sm:%s91]
    %93 = vrot.lane.b32.xlu0 %v92, 24
    %v94 = vpop.permute.xlu0 %93
    %vm95 = vcmask 261312
    %96 = vst.msk [vmem:[#allocation0] sm:$0x3] %vm95, %v94
    %s97 = scalar_lea.vmem %s0, 2
    %s98 = smov 3
    %v99 = vld [vmem:[%s97] ss:$16 sm:%s98]
    %100 = vrot.lane.b32.xlu0 %v99, 16
    %v101 = vpop.permute.xlu0 %100
    %vm102 = vcmask 195712
    %103 = vst.msk [vmem:[#allocation0] sm:$0x3] %vm102, %v101
    %s104 = scalar_lea.vmem %s0, 1
    %s105 = smov 3
    %v106 = vld [vmem:[%s104] ss:$16 sm:%s105]
    %107 = vrot.lane.b32.xlu0 %v106, 8
    %v108 = vpop.permute.xlu0 %107
    %vm109 = vcmask 130112
    %110 = vst.msk [vmem:[#allocation0] sm:$0x3] %vm109, %v108
    %s112 = sshllo.u32 0, 2
    %v114 = vld [vmem:[#allocation0] sm:%s112]
    %s115 = sshllo.u32 0, 2
    %116 = vst [vmem:[%s1] sm:%s115] %v114

// kernel: _lambda_.1
$region0: #{_lambda_.1}
  #allocation0 [shape = 'u32[]', space=smem, size = 0x4, offset = 0x4, fixed_abs, tag = 'smem constant byte address 0x4 - core index']
  #allocation1 [shape = 'u32[144,128]{1,0:T(1,128)}', space=vmem, size = 0x12000, scoped, tag = 'internal scratch']
  %s0 = inlined_call_operand.vmem [shape: bf16[32,192], index: 0, kind: input, shape index: {}]
  %s1 = inlined_call_operand.vmem [shape: bf16[32,64], index: 1, kind: input, shape index: {}]
  %s2 = inlined_call_operand.vmem [shape: bf16[192,128], index: 2, kind: input, shape index: {}]
  %s3 = inlined_call_operand.vmem [shape: bf16[3,128,128], index: 3, kind: input, shape index: {}]
  %s4 = inlined_call_operand.vmem [shape: bf16[64,128], index: 4, kind: input, shape index: {}]
  %s5 = inlined_call_operand.vmem [shape: bf16[128,128], index: 5, kind: input, shape index: {}]
  %s6 = inlined_call_operand.vmem [shape: f32[1,128], index: 6, kind: input, shape index: {}]
  %s7 = inlined_call_operand.vmem [shape: f32[1,128], index: 7, kind: input, shape index: {}]
  %s8 = inlined_call_operand.vmem [shape: f32[1,128], index: 8, kind: input, shape index: {}]
  %s9 = inlined_call_operand.vmem [shape: f32[32,128], index: 9, kind: input, shape index: {}]
  %s10 = inlined_call_operand.vmem [shape: f32[32,128], index: 10, kind: input, shape index: {}]
  %s11 = inlined_call_operand.vmem [shape: f32[1,128], index: 11, kind: input, shape index: {}]
  %s12 = inlined_call_operand.vmem [shape: f32[32,1], index: 12, kind: input, shape index: {}]
  %s13 = inlined_call_operand.vmem [shape: f32[32,1], index: 13, kind: input, shape index: {}]
  %s14 = inlined_call_operand.vmem [shape: f32[32,128], index: 14, kind: output, shape index: {}]
  %s15 = sld [smem:[#allocation0]]
  $region66: #{_lambda_.1} parent=0
    _
  %s17 = ssub.s32 1, %s15
  %s18 = scalar_select 0, %s17, %s15
  // Predicated region
  $region2: #{_lambda_.1} parent=0 // pred_check
    _
  $region3: #{_lambda_.1} parent=0 // pred_check_branch
    %20 = sbr.rel (0) target = $region5
  $region4: #{_lambda_.1} parent=0 // pred_region
    _
  $region5: #{_lambda_.1} parent=0 // pred_fallthru
    _
  // Predicated region
  $region6: #{_lambda_.1} parent=0 // pred_check
    _
  $region7: #{_lambda_.1} parent=0 // pred_check_branch
    %22 = sbr.rel (0) target = $region9
  $region8: #{_lambda_.1} parent=0 // pred_region
    _
  $region9: #{_lambda_.1} parent=0 // pred_fallthru
    _
  // Predicated region
  $region10: #{_lambda_.1} parent=0 // pred_check
    _
  $region11: #{_lambda_.1} parent=0 // pred_check_branch
    %24 = sbr.rel (0) target = $region13
  $region12: #{_lambda_.1} parent=0 // pred_region
    _
  $region13: #{_lambda_.1} parent=0 // pred_fallthru
    _
  // Predicated region
  $region14: #{_lambda_.1} parent=0 // pred_check
    _
  $region15: #{_lambda_.1} parent=0 // pred_check_branch
    %26 = sbr.rel (0) target = $region17
  $region16: #{_lambda_.1} parent=0 // pred_region
    _
  $region17: #{_lambda_.1} parent=0 // pred_fallthru
    _
  // Predicated region
  $region18: #{_lambda_.1} parent=0 // pred_check
    _
  $region19: #{_lambda_.1} parent=0 // pred_check_branch
    %28 = sbr.rel (0) target = $region21
  $region20: #{_lambda_.1} parent=0 // pred_region
    _
  $region21: #{_lambda_.1} parent=0 // pred_fallthru
    _
  // Predicated region
  $region22: #{_lambda_.1} parent=0 // pred_check
    _
  $region23: #{_lambda_.1} parent=0 // pred_check_branch
    %30 = sbr.rel (0) target = $region25
  $region24: #{_lambda_.1} parent=0 // pred_region
    _
  $region25: #{_lambda_.1} parent=0 // pred_fallthru
    _
  // Predicated region
  $region26: #{_lambda_.1} parent=0 // pred_check
    _
  $region27: #{_lambda_.1} parent=0 // pred_check_branch
    %32 = sbr.rel (0) target = $region29
  $region28: #{_lambda_.1} parent=0 // pred_region
    _
  $region29: #{_lambda_.1} parent=0 // pred_fallthru
    _
  // Predicated region
  $region30: #{_lambda_.1} parent=0 // pred_check
    _
  $region31: #{_lambda_.1} parent=0 // pred_check_branch
    %34 = sbr.rel (0) target = $region33
  $region32: #{_lambda_.1} parent=0 // pred_region
    _
  $region33: #{_lambda_.1} parent=0 // pred_fallthru
    _
  // Predicated region
  $region34: #{_lambda_.1} parent=0 // pred_check
    _
  $region35: #{_lambda_.1} parent=0 // pred_check_branch
    %36 = sbr.rel (0) target = $region37
  $region36: #{_lambda_.1} parent=0 // pred_region
    _
  $region37: #{_lambda_.1} parent=0 // pred_fallthru
    _
  // Predicated region
  $region38: #{_lambda_.1} parent=0 // pred_check
    _
  $region39: #{_lambda_.1} parent=0 // pred_check_branch
    %38 = sbr.rel (0) target = $region41
  $region40: #{_lambda_.1} parent=0 // pred_region
    _
  $region41: #{_lambda_.1} parent=0 // pred_fallthru
    _
  // Predicated region
  $region42: #{_lambda_.1} parent=0 // pred_check
    _
  $region43: #{_lambda_.1} parent=0 // pred_check_branch
    %40 = sbr.rel (0) target = $region45
  $region44: #{_lambda_.1} parent=0 // pred_region
    _
  $region45: #{_lambda_.1} parent=0 // pred_fallthru
    _
  // Predicated region
  $region46: #{_lambda_.1} parent=0 // pred_check
    _
  $region47: #{_lambda_.1} parent=0 // pred_check_branch
    %42 = sbr.rel (0) target = $region49
  $region48: #{_lambda_.1} parent=0 // pred_region
    _
  $region49: #{_lambda_.1} parent=0 // pred_fallthru
    _
  // Predicated region
  $region50: #{_lambda_.1} parent=0 // pred_check
    _
  $region51: #{_lambda_.1} parent=0 // pred_check_branch
    %44 = sbr.rel (0) target = $region53
  $region52: #{_lambda_.1} parent=0 // pred_region
    _
  $region53: #{_lambda_.1} parent=0 // pred_fallthru
    _
  // Predicated region
  $region54: #{_lambda_.1} parent=0 // pred_check
    _
  $region55: #{_lambda_.1} parent=0 // pred_check_branch
    %46 = sbr.rel (0) target = $region57
  $region56: #{_lambda_.1} parent=0 // pred_region
    _
  $region57: #{_lambda_.1} parent=0 // pred_fallthru
    _
  %v48 = vld [vmem:[%s0] sm:$0xff]
  %v49 = vld [vmem:[%s0 + $0x8] sm:$0xff]
  %v50 = vld [vmem:[%s0 + $0x10] sm:$0xff]
  %v51 = vld [vmem:[%s0 + $0x18] sm:$0xff]
  %v52 = vld [vmem:[%s2] sm:$0xf]
  %v53 = vld [vmem:[%s2 + $0x4] sm:$0xf]
  %v54 = vld [vmem:[%s2 + $0x8] sm:$0xf]
  %v55 = vld [vmem:[%s2 + $0xc] sm:$0xf]
  %v56 = vld [vmem:[%s2 + $0x10] sm:$0xf]
  %v57 = vld [vmem:[%s2 + $0x14] sm:$0xf]
  %v58 = vld [vmem:[%s2 + $0x18] sm:$0xf]
  %v59 = vld [vmem:[%s2 + $0x1c] sm:$0xf]
  %v60 = vld [vmem:[%s2 + $0x20] sm:$0xf]
  %v61 = vld [vmem:[%s2 + $0x24] sm:$0xf]
  %v62 = vld [vmem:[%s2 + $0x28] sm:$0xf]
  %v63 = vld [vmem:[%s2 + $0x2c] sm:$0xf]
  %v64 = vld [vmem:[%s2 + $0x30] sm:$0xf]
  %v65 = vld [vmem:[%s2 + $0x34] sm:$0xf]
  %v66 = vld [vmem:[%s2 + $0x38] sm:$0xf]
  %v67 = vld [vmem:[%s2 + $0x3c] sm:$0xf]
  %v68 = vld [vmem:[%s2 + $0x40] sm:$0xf]
  %v69 = vld [vmem:[%s2 + $0x44] sm:$0xf]
  %v70 = vld [vmem:[%s2 + $0x48] sm:$0xf]
  %v71 = vld [vmem:[%s2 + $0x4c] sm:$0xf]
  %v72 = vld [vmem:[%s2 + $0x50] sm:$0xf]
  %v73 = vld [vmem:[%s2 + $0x54] sm:$0xf]
  %v74 = vld [vmem:[%s2 + $0x58] sm:$0xf]
  %v75 = vld [vmem:[%s2 + $0x5c] sm:$0xf]
  %v76 = vld [vmem:[%s6] sm:$0x1]
  %v78 = vlaneseq
  %v79 = vshrl.u32 %v78, 7
  %v80 = vsub.s32 0, %v79
  %v81 = vrot.slane %v76, %v80
  %v87 = vunpack.c.l.b16 %v48
  %v88 = vunpack.c.h.b16 %v48
  %v89 = vunpack.c.l.b16 %v49
  %v90 = vunpack.c.h.b16 %v49
  %v91 = vunpack.c.l.b16 %v50
  %v92 = vunpack.c.h.b16 %v50
  %v93 = vunpack.c.l.b16 %v51
  %v94 = vunpack.c.h.b16 %v51
  %v95 = vpack.c.b16 %v89, %v87
  %v96 = vpack.c.b16 %v90, %v88
  %v97 = vpack.c.b16 %v93, %v91
  %v98 = vpack.c.b16 %v94, %v92
  %v125 = vunpack.c.l.b16 %v52
  %v126 = vunpack.c.l.b16 %v53
  %v127 = vunpack.c.l.b16 %v54
  %v128 = vunpack.c.l.b16 %v55
  %v129 = vunpack.c.l.b16 %v56
  %v130 = vunpack.c.l.b16 %v57
  %v131 = vunpack.c.l.b16 %v58
  %v132 = vunpack.c.l.b16 %v59
  %v133 = vunpack.c.l.b16 %v60
  %v134 = vunpack.c.l.b16 %v61
  %v135 = vunpack.c.l.b16 %v62
  %v136 = vunpack.c.l.b16 %v63
  %v137 = vunpack.c.l.b16 %v64
  %v138 = vunpack.c.l.b16 %v65
  %v139 = vunpack.c.l.b16 %v66
  %v140 = vunpack.c.l.b16 %v67
  %v141 = vunpack.c.l.b16 %v68
  %v142 = vunpack.c.l.b16 %v69
  %v143 = vunpack.c.l.b16 %v70
  %v144 = vunpack.c.l.b16 %v71
  %v145 = vunpack.c.l.b16 %v72
  %v146 = vunpack.c.l.b16 %v73
  %v147 = vunpack.c.l.b16 %v74
  %v148 = vunpack.c.l.b16 %v75
  %v149 = vpack.c.b16 %v126, %v125
  %v150 = vpack.c.b16 %v128, %v127
  %v151 = vpack.c.b16 %v130, %v129
  %v152 = vpack.c.b16 %v132, %v131
  %v153 = vpack.c.b16 %v134, %v133
  %v154 = vpack.c.b16 %v136, %v135
  %v155 = vpack.c.b16 %v138, %v137
  %v156 = vpack.c.b16 %v140, %v139
  %v157 = vpack.c.b16 %v142, %v141
  %v158 = vpack.c.b16 %v144, %v143
  %v159 = vpack.c.b16 %v146, %v145
  %v160 = vpack.c.b16 %v148, %v147
  %vm173 = vcmask 523264
  %v175 = vsel %vm173, %v96, 0
  %v178 = vsel %vm173, %v98, 0
  %180 = vmatprep.subr.bf16.mxu0 0
  %181 = vmatpush1.bf16.msra.mxu0 %v149
  %182 = vmatprep.subr.bf16.mxu0 0
  %183 = vmatpush1.bf16.msra.mxu0 %v150
  %184 = vmatprep.subr.bf16.mxu0 0
  %185 = vmatpush1.bf16.msra.mxu0 %v151
  %186 = vmatprep.subr.bf16.mxu0 0
  %187 = vmatpush1.bf16.msra.mxu0 %v152
  %188 = vmatprep.subr.bf16.mxu0 0
  %189 = vmatpush1.bf16.msra.mxu0 %v153
  %190 = vmatprep.subr.bf16.mxu0 0
  %191 = vmatpush1.bf16.msra.mxu0 %v154
  %192 = vmatprep.subr.bf16.mxu0 0
  %193 = vmatpush1.bf16.msra.mxu0 %v155
  %194 = vmatprep.subr.bf16.mxu0 0
  %195 = vmatpush1.bf16.msra.mxu0 %v156
  %196 = vmatprep.subr.bf16.mxu0 0
  %197 = vmatpush1.bf16.msra.mxu0 %v157
  %198 = vmatprep.subr.bf16.mxu0 0
  %199 = vmatpush1.bf16.msra.mxu0 %v158
  %200 = vmatprep.subr.bf16.mxu0 0
  %201 = vmatpush1.bf16.msra.mxu0 %v159
  %202 = vmatprep.subr.bf16.mxu0 0
  %203 = vmatpush1.bf16.msra.mxu0 %v160
  %204 = vmatprep.subr.bf16.mxu0 0
  %205 = vmatpush1.bf16.msra.mxu0 0
  %206 = vmatprep.subr.bf16.mxu0 0
  %207 = vmatpush1.bf16.msra.mxu0 0
  %208 = vmatprep.subr.bf16.mxu0 0
  %209 = vmatpush1.bf16.msra.mxu0 0
  %210 = vmatprep.subr.bf16.mxu0 0
  %211 = vmatpush1.bf16.msra.mxu0 0
  %212 = vmatprep.mubr.bf16.mxu0 %v175
  %213 = vmatmul.mubr.bf16.gmra.mrb[0].mxu0 %v95
  %v214 = vpop.f32.mrb[0].mxu0
  %v215 = vadd.f32 %v81, %v214
  %v216 = vpop.f32.mrb[0].mxu0
  %v217 = vpop.f32.mrb[0].mxu0
  %v218 = vadd.f32 %v81, %v217
  %v219 = vpop.f32.mrb[0].mxu0
  %220 = vmatprep.mubr.bf16.mxu0 %v178
  %221 = vmatmul.mubr.bf16.gmra.mrb[0].mxu0 %v97
  %v222 = vpop.f32.mrb[0].mxu0
  %v223 = vadd.f32 %v81, %v222
  %v224 = vpop.f32.mrb[0].mxu0
  %v225 = vpop.f32.mrb[0].mxu0
  %v226 = vadd.f32 %v81, %v225
  %v227 = vpop.f32.mrb[0].mxu0
  %228 = vdwg.mxu0
  %v229 = vmul.f32 %v215, %v215
  %v230 = vmul.f32 %v218, %v218
  %v231 = vmul.f32 %v223, %v223
  %v232 = vmul.f32 %v226, %v226
  %v233 = vpack.c.bf16 %v230, %v229
  %v234 = vpack.c.bf16 %v232, %v231
  %v235 = vld [vmem:[%s5] sm:$0xf]
  %v236 = vld [vmem:[%s5 + $0x4] sm:$0xf]
  %v237 = vld [vmem:[%s5 + $0x8] sm:$0xf]
  %v238 = vld [vmem:[%s5 + $0xc] sm:$0xf]
  %v239 = vld [vmem:[%s5 + $0x10] sm:$0xf]
  %v240 = vld [vmem:[%s5 + $0x14] sm:$0xf]
  %v241 = vld [vmem:[%s5 + $0x18] sm:$0xf]
  %v242 = vld [vmem:[%s5 + $0x1c] sm:$0xf]
  %v243 = vld [vmem:[%s5 + $0x20] sm:$0xf]
  %v244 = vld [vmem:[%s5 + $0x24] sm:$0xf]
  %v245 = vld [vmem:[%s5 + $0x28] sm:$0xf]
  %v246 = vld [vmem:[%s5 + $0x2c] sm:$0xf]
  %v247 = vld [vmem:[%s5 + $0x30] sm:$0xf]
  %v248 = vld [vmem:[%s5 + $0x34] sm:$0xf]
  %v249 = vld [vmem:[%s5 + $0x38] sm:$0xf]
  %v250 = vld [vmem:[%s5 + $0x3c] sm:$0xf]
  %v267 = vunpack.c.l.b16 %v235
  %v268 = vunpack.c.l.b16 %v236
  %v269 = vunpack.c.l.b16 %v237
  %v270 = vunpack.c.l.b16 %v238
  %v271 = vunpack.c.l.b16 %v239
  %v272 = vunpack.c.l.b16 %v240
  %v273 = vunpack.c.l.b16 %v241
  %v274 = vunpack.c.l.b16 %v242
  %v275 = vunpack.c.l.b16 %v243
  %v276 = vunpack.c.l.b16 %v244
  %v277 = vunpack.c.l.b16 %v245
  %v278 = vunpack.c.l.b16 %v246
  %v279 = vunpack.c.l.b16 %v247
  %v280 = vunpack.c.l.b16 %v248
  %v281 = vunpack.c.l.b16 %v249
  %v282 = vunpack.c.l.b16 %v250
  %v283 = vpack.c.b16 %v268, %v267
  %v284 = vpack.c.b16 %v270, %v269
  %v285 = vpack.c.b16 %v272, %v271
  %v286 = vpack.c.b16 %v274, %v273
  %v287 = vpack.c.b16 %v276, %v275
  %v288 = vpack.c.b16 %v278, %v277
  %v289 = vpack.c.b16 %v280, %v279
  %v290 = vpack.c.b16 %v282, %v281
  %299 = vmatprep.subr.bf16.mxu0 0
  %300 = vmatpush1.bf16.msra.mxu0 %v283
  %301 = vmatprep.subr.bf16.mxu0 0
  %302 = vmatpush1.bf16.msra.mxu0 %v284
  %303 = vmatprep.subr.bf16.mxu0 0
  %304 = vmatpush1.bf16.msra.mxu0 %v285
  %305 = vmatprep.subr.bf16.mxu0 0
  %306 = vmatpush1.bf16.msra.mxu0 %v286
  %307 = vmatprep.subr.bf16.mxu0 0
  %308 = vmatpush1.bf16.msra.mxu0 %v287
  %309 = vmatprep.subr.bf16.mxu0 0
  %310 = vmatpush1.bf16.msra.mxu0 %v288
  %311 = vmatprep.subr.bf16.mxu0 0
  %312 = vmatpush1.bf16.msra.mxu0 %v289
  %313 = vmatprep.subr.bf16.mxu0 0
  %314 = vmatpush1.bf16.msra.mxu0 %v290
  %315 = vmatprep.subr.bf16.mxu0 0
  %316 = vmatpush1.bf16.msra.mxu0 0
  %317 = vmatprep.subr.bf16.mxu0 0
  %318 = vmatpush1.bf16.msra.mxu0 0
  %319 = vmatprep.subr.bf16.mxu0 0
  %320 = vmatpush1.bf16.msra.mxu0 0
  %321 = vmatprep.subr.bf16.mxu0 0
  %322 = vmatpush1.bf16.msra.mxu0 0
  %323 = vmatprep.subr.bf16.mxu0 0
  %324 = vmatpush1.bf16.msra.mxu0 0
  %325 = vmatprep.subr.bf16.mxu0 0
  %326 = vmatpush1.bf16.msra.mxu0 0
  %327 = vmatprep.subr.bf16.mxu0 0
  %328 = vmatpush1.bf16.msra.mxu0 0
  %329 = vmatprep.subr.bf16.mxu0 0
  %330 = vmatpush1.bf16.msra.mxu0 0
  %331 = vmatprep.mubr.bf16.mxu0 0
  %332 = vmatmul.mubr.bf16.gmra.mrb[0].mxu0 %v233
  %v333 = vpop.f32.mrb[0].mxu0
  %v334 = vadd.f32 0.0, %v333
  %v335 = vpop.f32.mrb[0].mxu0
  %v336 = vpop.f32.mrb[0].mxu0
  %v337 = vadd.f32 0.0, %v336
  %v338 = vpop.f32.mrb[0].mxu0
  %339 = vmatprep.mubr.bf16.mxu0 0
  %340 = vmatmul.mubr.bf16.gmra.mrb[0].mxu0 %v234
  %v341 = vpop.f32.mrb[0].mxu0
  %v342 = vadd.f32 0.0, %v341
  %v343 = vpop.f32.mrb[0].mxu0
  %v344 = vpop.f32.mrb[0].mxu0
  %v345 = vadd.f32 0.0, %v344
  %v346 = vpop.f32.mrb[0].mxu0
  %347 = vdwg.mxu0
  %v348 = vmax.f32 %v334, 1e-24
  %v349 = vmax.f32 %v337, 1e-24
  %v350 = vmax.f32 %v342, 1e-24
  %v351 = vmax.f32 %v345, 1e-24
  %v352 = vrsqrt.pop %v348
  %v353 = vrsqrt.pop %v349
  %v354 = vrsqrt.pop %v350
  %v355 = vrsqrt.pop %v351
  %v356 = vmul.f32 %v215, %v352
  %v357 = vmul.f32 %v218, %v353
  %v358 = vmul.f32 %v223, %v354
  %v359 = vmul.f32 %v226, %v355
  %v360 = vld [vmem:[%s9] sm:$0xff]
  %v361 = vld [vmem:[%s9 + $0x8] sm:$0xff]
  %v362 = vld [vmem:[%s9 + $0x10] sm:$0xff]
  %v363 = vld [vmem:[%s9 + $0x18] sm:$0xff]
  %v364 = vmul.f32 %v356, %v360
  %v365 = vmul.f32 %v357, %v361
  %v366 = vmul.f32 %v358, %v362
  %v367 = vmul.f32 %v359, %v363
  %v368 = vld [vmem:[%s10] sm:$0xff]
  %v369 = vld [vmem:[%s10 + $0x8] sm:$0xff]
  %v370 = vld [vmem:[%s10 + $0x10] sm:$0xff]
  %v371 = vld [vmem:[%s10 + $0x18] sm:$0xff]
  %v372 = vadd.f32 %v364, %v368
  %v373 = vadd.f32 %v365, %v369
  %v374 = vadd.f32 %v366, %v370
  %v375 = vadd.f32 %v367, %v371
  %v376 = vxor.u32 %v372, 2147483648
  %v377 = vxor.u32 %v373, 2147483648
  %v378 = vxor.u32 %v374, 2147483648
  %v379 = vxor.u32 %v375, 2147483648
  %v380 = vmul.f32 %v376, 1.442695
  %v381 = vpow.pop %v380
  %v382 = vmul.f32 %v377, 1.442695
  %v383 = vpow.pop %v382
  %v384 = vmul.f32 %v378, 1.442695
  %v385 = vpow.pop %v384
  %v386 = vmul.f32 %v379, 1.442695
  %v387 = vpow.pop %v386
  %v388 = vadd.f32 %v381, 1.0
  %v389 = vadd.f32 %v383, 1.0
  %v390 = vadd.f32 %v385, 1.0
  %v391 = vadd.f32 %v387, 1.0
  %v392 = vrcp.pop %v388
  %v393 = vmul.f32 1.0, %v392
  %v394 = vrcp.pop %v389
  %v395 = vmul.f32 1.0, %v394
  %v396 = vrcp.pop %v390
  %v397 = vmul.f32 1.0, %v396
  %v398 = vrcp.pop %v391
  %v399 = vmul.f32 1.0, %v398
  %v400 = vmul.f32 %v372, %v393
  %v401 = vmul.f32 %v373, %v395
  %v402 = vmul.f32 %v374, %v397
  %v403 = vmul.f32 %v375, %v399
  %v404 = vpack.c.bf16 %v401, %v400
  %v405 = vpack.c.bf16 %v403, %v402
  %s406 = scalar_lea.vmem %s3, 64
  %v407 = vld [vmem:[%s406] sm:$0xf]
  %v408 = vld [vmem:[%s406 + $0x4] sm:$0xf]
  %v409 = vld [vmem:[%s406 + $0x8] sm:$0xf]
  %v410 = vld [vmem:[%s406 + $0xc] sm:$0xf]
  %v411 = vld [vmem:[%s406 + $0x10] sm:$0xf]
  %v412 = vld [vmem:[%s406 + $0x14] sm:$0xf]
  %v413 = vld [vmem:[%s406 + $0x18] sm:$0xf]
  %v414 = vld [vmem:[%s406 + $0x1c] sm:$0xf]
  %v415 = vld [vmem:[%s406 + $0x20] sm:$0xf]
  %v416 = vld [vmem:[%s406 + $0x24] sm:$0xf]
  %v417 = vld [vmem:[%s406 + $0x28] sm:$0xf]
  %v418 = vld [vmem:[%s406 + $0x2c] sm:$0xf]
  %v419 = vld [vmem:[%s406 + $0x30] sm:$0xf]
  %v420 = vld [vmem:[%s406 + $0x34] sm:$0xf]
  %v421 = vld [vmem:[%s406 + $0x38] sm:$0xf]
  %v422 = vld [vmem:[%s406 + $0x3c] sm:$0xf]
  %v423 = vld [vmem:[%s7] sm:$0x1]
  %v425 = vlaneseq
  %v426 = vshrl.u32 %v425, 7
  %v427 = vsub.s32 0, %v426
  %v428 = vrot.slane %v423, %v427
  %v446 = vunpack.c.l.b16 %v407
  %v447 = vunpack.c.l.b16 %v408
  %v448 = vunpack.c.l.b16 %v409
  %v449 = vunpack.c.l.b16 %v410
  %v450 = vunpack.c.l.b16 %v411
  %v451 = vunpack.c.l.b16 %v412
  %v452 = vunpack.c.l.b16 %v413
  %v453 = vunpack.c.l.b16 %v414
  %v454 = vunpack.c.l.b16 %v415
  %v455 = vunpack.c.l.b16 %v416
  %v456 = vunpack.c.l.b16 %v417
  %v457 = vunpack.c.l.b16 %v418
  %v458 = vunpack.c.l.b16 %v419
  %v459 = vunpack.c.l.b16 %v420
  %v460 = vunpack.c.l.b16 %v421
  %v461 = vunpack.c.l.b16 %v422
  %v462 = vpack.c.b16 %v447, %v446
  %v463 = vpack.c.b16 %v449, %v448
  %v464 = vpack.c.b16 %v451, %v450
  %v465 = vpack.c.b16 %v453, %v452
  %v466 = vpack.c.b16 %v455, %v454
  %v467 = vpack.c.b16 %v457, %v456
  %v468 = vpack.c.b16 %v459, %v458
  %v469 = vpack.c.b16 %v461, %v460
  %478 = vmatprep.subr.bf16.mxu0 0
  %479 = vmatpush1.bf16.msra.mxu0 %v462
  %480 = vmatprep.subr.bf16.mxu0 0
  %481 = vmatpush1.bf16.msra.mxu0 %v463
  %482 = vmatprep.subr.bf16.mxu0 0
  %483 = vmatpush1.bf16.msra.mxu0 %v464
  %484 = vmatprep.subr.bf16.mxu0 0
  %485 = vmatpush1.bf16.msra.mxu0 %v465
  %486 = vmatprep.subr.bf16.mxu0 0
  %487 = vmatpush1.bf16.msra.mxu0 %v466
  %488 = vmatprep.subr.bf16.mxu0 0
  %489 = vmatpush1.bf16.msra.mxu0 %v467
  %490 = vmatprep.subr.bf16.mxu0 0
  %491 = vmatpush1.bf16.msra.mxu0 %v468
  %492 = vmatprep.subr.bf16.mxu0 0
  %493 = vmatpush1.bf16.msra.mxu0 %v469
  %494 = vmatprep.subr.bf16.mxu0 0
  %495 = vmatpush1.bf16.msra.mxu0 0
  %496 = vmatprep.subr.bf16.mxu0 0
  %497 = vmatpush1.bf16.msra.mxu0 0
  %498 = vmatprep.subr.bf16.mxu0 0
  %499 = vmatpush1.bf16.msra.mxu0 0
  %500 = vmatprep.subr.bf16.mxu0 0
  %501 = vmatpush1.bf16.msra.mxu0 0
  %502 = vmatprep.subr.bf16.mxu0 0
  %503 = vmatpush1.bf16.msra.mxu0 0
  %504 = vmatprep.subr.bf16.mxu0 0
  %505 = vmatpush1.bf16.msra.mxu0 0
  %506 = vmatprep.subr.bf16.mxu0 0
  %507 = vmatpush1.bf16.msra.mxu0 0
  %508 = vmatprep.subr.bf16.mxu0 0
  %509 = vmatpush1.bf16.msra.mxu0 0
  %510 = vmatprep.mubr.bf16.mxu0 0
  %511 = vmatmul.mubr.bf16.gmra.mrb[0].mxu0 %v404
  %v512 = vpop.f32.mrb[0].mxu0
  %v513 = vadd.f32 %v428, %v512
  %v514 = vpop.f32.mrb[0].mxu0
  %v515 = vpop.f32.mrb[0].mxu0
  %v516 = vadd.f32 %v428, %v515
  %v517 = vpop.f32.mrb[0].mxu0
  %518 = vmatprep.mubr.bf16.mxu0 0
  %519 = vmatmul.mubr.bf16.gmra.mrb[0].mxu0 %v405
  %v520 = vpop.f32.mrb[0].mxu0
  %v521 = vadd.f32 %v428, %v520
  %v522 = vpop.f32.mrb[0].mxu0
  %v523 = vpop.f32.mrb[0].mxu0
  %v524 = vadd.f32 %v428, %v523
  %v525 = vpop.f32.mrb[0].mxu0
  %526 = vdwg.mxu0
  %v527 = vld [vmem:[%s3] sm:$0xf]
  %v528 = vld [vmem:[%s3 + $0x4] sm:$0xf]
  %v529 = vld [vmem:[%s3 + $0x8] sm:$0xf]
  %v530 = vld [vmem:[%s3 + $0xc] sm:$0xf]
  %v531 = vld [vmem:[%s3 + $0x10] sm:$0xf]
  %v532 = vld [vmem:[%s3 + $0x14] sm:$0xf]
  %v533 = vld [vmem:[%s3 + $0x18] sm:$0xf]
  %v534 = vld [vmem:[%s3 + $0x1c] sm:$0xf]
  %v535 = vld [vmem:[%s3 + $0x20] sm:$0xf]
  %v536 = vld [vmem:[%s3 + $0x24] sm:$0xf]
  %v537 = vld [vmem:[%s3 + $0x28] sm:$0xf]
  %v538 = vld [vmem:[%s3 + $0x2c] sm:$0xf]
  %v539 = vld [vmem:[%s3 + $0x30] sm:$0xf]
  %v540 = vld [vmem:[%s3 + $0x34] sm:$0xf]
  %v541 = vld [vmem:[%s3 + $0x38] sm:$0xf]
  %v542 = vld [vmem:[%s3 + $0x3c] sm:$0xf]
  %v559 = vunpack.c.l.b16 %v527
  %v560 = vunpack.c.l.b16 %v528
  %v561 = vunpack.c.l.b16 %v529
  %v562 = vunpack.c.l.b16 %v530
  %v563 = vunpack.c.l.b16 %v531
  %v564 = vunpack.c.l.b16 %v532
  %v565 = vunpack.c.l.b16 %v533
  %v566 = vunpack.c.l.b16 %v534
  %v567 = vunpack.c.l.b16 %v535
  %v568 = vunpack.c.l.b16 %v536
  %v569 = vunpack.c.l.b16 %v537
  %v570 = vunpack.c.l.b16 %v538
  %v571 = vunpack.c.l.b16 %v539
  %v572 = vunpack.c.l.b16 %v540
  %v573 = vunpack.c.l.b16 %v541
  %v574 = vunpack.c.l.b16 %v542
  %v575 = vpack.c.b16 %v560, %v559
  %v576 = vpack.c.b16 %v562, %v561
  %v577 = vpack.c.b16 %v564, %v563
  %v578 = vpack.c.b16 %v566, %v565
  %v579 = vpack.c.b16 %v568, %v567
  %v580 = vpack.c.b16 %v570, %v569
  %v581 = vpack.c.b16 %v572, %v571
  %v582 = vpack.c.b16 %v574, %v573
  %591 = vmatprep.subr.bf16.mxu0 0
  %592 = vmatpush1.bf16.msra.mxu0 %v575
  %593 = vmatprep.subr.bf16.mxu0 0
  %594 = vmatpush1.bf16.msra.mxu0 %v576
  %595 = vmatprep.subr.bf16.mxu0 0
  %596 = vmatpush1.bf16.msra.mxu0 %v577
  %597 = vmatprep.subr.bf16.mxu0 0
  %598 = vmatpush1.bf16.msra.mxu0 %v578
  %599 = vmatprep.subr.bf16.mxu0 0
  %600 = vmatpush1.bf16.msra.mxu0 %v579
  %601 = vmatprep.subr.bf16.mxu0 0
  %602 = vmatpush1.bf16.msra.mxu0 %v580
  %603 = vmatprep.subr.bf16.mxu0 0
  %604 = vmatpush1.bf16.msra.mxu0 %v581
  %605 = vmatprep.subr.bf16.mxu0 0
  %606 = vmatpush1.bf16.msra.mxu0 %v582
  %607 = vmatprep.subr.bf16.mxu0 0
  %608 = vmatpush1.bf16.msra.mxu0 0
  %609 = vmatprep.subr.bf16.mxu0 0
  %610 = vmatpush1.bf16.msra.mxu0 0
  %611 = vmatprep.subr.bf16.mxu0 0
  %612 = vmatpush1.bf16.msra.mxu0 0
  %613 = vmatprep.subr.bf16.mxu0 0
  %614 = vmatpush1.bf16.msra.mxu0 0
  %615 = vmatprep.subr.bf16.mxu0 0
  %616 = vmatpush1.bf16.msra.mxu0 0
  %617 = vmatprep.subr.bf16.mxu0 0
  %618 = vmatpush1.bf16.msra.mxu0 0
  %619 = vmatprep.subr.bf16.mxu0 0
  %620 = vmatpush1.bf16.msra.mxu0 0
  %621 = vmatprep.subr.bf16.mxu0 0
  %622 = vmatpush1.bf16.msra.mxu0 0
  %623 = vmatprep.mubr.bf16.mxu0 0
  %624 = vmatmul.mubr.bf16.gmra.mrb[0].mxu0 %v404
  %v625 = vpop.f32.mrb[0].mxu0
  %v626 = vadd.f32 0.0, %v625
  %v627 = vpop.f32.mrb[0].mxu0
  %v628 = vpop.f32.mrb[0].mxu0
  %v629 = vadd.f32 0.0, %v628
  %v630 = vpop.f32.mrb[0].mxu0
  %631 = vmatprep.mubr.bf16.mxu0 0
  %632 = vmatmul.mubr.bf16.gmra.mrb[0].mxu0 %v405
  %v633 = vpop.f32.mrb[0].mxu0
  %v634 = vadd.f32 0.0, %v633
  %v635 = vpop.f32.mrb[0].mxu0
  %v636 = vpop.f32.mrb[0].mxu0
  %v637 = vadd.f32 0.0, %v636
  %v638 = vpop.f32.mrb[0].mxu0
  %639 = vdwg.mxu0
  %v640 = vrot.slane %v626, 7
  %v641 = vrot.slane %v629, 7
  %v642 = vrot.slane %v634, 7
  %v643 = vrot.slane %v637, 7
  %v644 = vlaneseq
  %v645 = vshrl.u32 %v644, 7
  %vm646 = vcmp.lt.s32.totalorder %v645, 1
  %v647 = vsel %vm646, %v642, %v643
  %v648 = vsel %vm646, %v641, %v642
  %v649 = vsel %vm646, %v640, %v641
  %v650 = vsel %vm646, %v643, %v640
  %v651 = vld [vmem:[%s12] sm:$0xff]
  %v652 = vld [vmem:[%s12 + $0x8] sm:$0xff]
  %v653 = vld [vmem:[%s12 + $0x10] sm:$0xff]
  %v654 = vld [vmem:[%s12 + $0x18] sm:$0xff]
  %656 = vset.pattern.permute.xlu0 0
  %657 = vperm.xlu0 %656, %v651
  %v658 = vpop.permute.xlu0 %657
  %661 = vset.pattern.permute.xlu0 0
  %662 = vperm.xlu0 %661, %v652
  %v663 = vpop.permute.xlu0 %662
  %666 = vset.pattern.permute.xlu0 0
  %667 = vperm.xlu0 %666, %v653
  %v668 = vpop.permute.xlu0 %667
  %671 = vset.pattern.permute.xlu0 0
  %672 = vperm.xlu0 %671, %v654
  %v673 = vpop.permute.xlu0 %672
  %v675 = vmul.f32 %v650, %v658
  %v676 = vmul.f32 %v649, %v663
  %v677 = vmul.f32 %v648, %v668
  %v678 = vmul.f32 %v647, %v673
  %v679 = vadd.f32 %v513, %v675
  %v680 = vadd.f32 %v516, %v676
  %v681 = vadd.f32 %v521, %v677
  %v682 = vadd.f32 %v524, %v678
  %s683 = scalar_lea.vmem %s3, 128
  %v684 = vld [vmem:[%s683] sm:$0xf]
  %v685 = vld [vmem:[%s683 + $0x4] sm:$0xf]
  %v686 = vld [vmem:[%s683 + $0x8] sm:$0xf]
  %v687 = vld [vmem:[%s683 + $0xc] sm:$0xf]
  %v688 = vld [vmem:[%s683 + $0x10] sm:$0xf]
  %v689 = vld [vmem:[%s683 + $0x14] sm:$0xf]
  %v690 = vld [vmem:[%s683 + $0x18] sm:$0xf]
  %v691 = vld [vmem:[%s683 + $0x1c] sm:$0xf]
  %v692 = vld [vmem:[%s683 + $0x20] sm:$0xf]
  %v693 = vld [vmem:[%s683 + $0x24] sm:$0xf]
  %v694 = vld [vmem:[%s683 + $0x28] sm:$0xf]
  %v695 = vld [vmem:[%s683 + $0x2c] sm:$0xf]
  %v696 = vld [vmem:[%s683 + $0x30] sm:$0xf]
  %v697 = vld [vmem:[%s683 + $0x34] sm:$0xf]
  %v698 = vld [vmem:[%s683 + $0x38] sm:$0xf]
  %v699 = vld [vmem:[%s683 + $0x3c] sm:$0xf]
  %v716 = vunpack.c.l.b16 %v684
  %v717 = vunpack.c.l.b16 %v685
  %v718 = vunpack.c.l.b16 %v686
  %v719 = vunpack.c.l.b16 %v687
  %v720 = vunpack.c.l.b16 %v688
  %v721 = vunpack.c.l.b16 %v689
  %v722 = vunpack.c.l.b16 %v690
  %v723 = vunpack.c.l.b16 %v691
  %v724 = vunpack.c.l.b16 %v692
  %v725 = vunpack.c.l.b16 %v693
  %v726 = vunpack.c.l.b16 %v694
  %v727 = vunpack.c.l.b16 %v695
  %v728 = vunpack.c.l.b16 %v696
  %v729 = vunpack.c.l.b16 %v697
  %v730 = vunpack.c.l.b16 %v698
  %v731 = vunpack.c.l.b16 %v699
  %v732 = vpack.c.b16 %v717, %v716
  %v733 = vpack.c.b16 %v719, %v718
  %v734 = vpack.c.b16 %v721, %v720
  %v735 = vpack.c.b16 %v723, %v722
  %v736 = vpack.c.b16 %v725, %v724
  %v737 = vpack.c.b16 %v727, %v726
  %v738 = vpack.c.b16 %v729, %v728
  %v739 = vpack.c.b16 %v731, %v730
  %748 = vmatprep.subr.bf16.mxu0 0
  %749 = vmatpush1.bf16.msra.mxu0 %v732
  %750 = vmatprep.subr.bf16.mxu0 0
  %751 = vmatpush1.bf16.msra.mxu0 %v733
  %752 = vmatprep.subr.bf16.mxu0 0
  %753 = vmatpush1.bf16.msra.mxu0 %v734
  %754 = vmatprep.subr.bf16.mxu0 0
  %755 = vmatpush1.bf16.msra.mxu0 %v735
  %756 = vmatprep.subr.bf16.mxu0 0
  %757 = vmatpush1.bf16.msra.mxu0 %v736
  %758 = vmatprep.subr.bf16.mxu0 0
  %759 = vmatpush1.bf16.msra.mxu0 %v737
  %760 = vmatprep.subr.bf16.mxu0 0
  %761 = vmatpush1.bf16.msra.mxu0 %v738
  %762 = vmatprep.subr.bf16.mxu0 0
  %763 = vmatpush1.bf16.msra.mxu0 %v739
  %764 = vmatprep.subr.bf16.mxu0 0
  %765 = vmatpush1.bf16.msra.mxu0 0
  %766 = vmatprep.subr.bf16.mxu0 0
  %767 = vmatpush1.bf16.msra.mxu0 0
  %768 = vmatprep.subr.bf16.mxu0 0
  %769 = vmatpush1.bf16.msra.mxu0 0
  %770 = vmatprep.subr.bf16.mxu0 0
  %771 = vmatpush1.bf16.msra.mxu0 0
  %772 = vmatprep.subr.bf16.mxu0 0
  %773 = vmatpush1.bf16.msra.mxu0 0
  %774 = vmatprep.subr.bf16.mxu0 0
  %775 = vmatpush1.bf16.msra.mxu0 0
  %776 = vmatprep.subr.bf16.mxu0 0
  %777 = vmatpush1.bf16.msra.mxu0 0
  %778 = vmatprep.subr.bf16.mxu0 0
  %779 = vmatpush1.bf16.msra.mxu0 0
  %780 = vmatprep.mubr.bf16.mxu0 0
  %781 = vmatmul.mubr.bf16.gmra.mrb[0].mxu0 %v404
  %v782 = vpop.f32.mrb[0].mxu0
  %v783 = vadd.f32 0.0, %v782
  %v784 = vpop.f32.mrb[0].mxu0
  %v785 = vpop.f32.mrb[0].mxu0
  %v786 = vadd.f32 0.0, %v785
  %v787 = vpop.f32.mrb[0].mxu0
  %788 = vmatprep.mubr.bf16.mxu0 0
  %789 = vmatmul.mubr.bf16.gmra.mrb[0].mxu0 %v405
  %v790 = vpop.f32.mrb[0].mxu0
  %v791 = vadd.f32 0.0, %v790
  %v792 = vpop.f32.mrb[0].mxu0
  %v793 = vpop.f32.mrb[0].mxu0
  %v794 = vadd.f32 0.0, %v793
  %v795 = vpop.f32.mrb[0].mxu0
  %796 = vdwg.mxu0
  %v797 = vrot.slane %v783, 1
  %v798 = vrot.slane %v786, 1
  %v799 = vrot.slane %v791, 1
  %v800 = vrot.slane %v794, 1
  %vm801 = vcmp.lt.s32.totalorder %v645, 7
  %v802 = vsel %vm801, %v799, %v800
  %v803 = vsel %vm801, %v798, %v799
  %v804 = vsel %vm801, %v797, %v798
  %v805 = vsel %vm801, %v800, %v797
  %v806 = vld [vmem:[%s13] sm:$0xff]
  %v807 = vld [vmem:[%s13 + $0x8] sm:$0xff]
  %v808 = vld [vmem:[%s13 + $0x10] sm:$0xff]
  %v809 = vld [vmem:[%s13 + $0x18] sm:$0xff]
  %811 = vset.pattern.permute.xlu0 0
  %812 = vperm.xlu0 %811, %v806
  %v813 = vpop.permute.xlu0 %812
  %816 = vset.pattern.permute.xlu0 0
  %817 = vperm.xlu0 %816, %v807
  %v818 = vpop.permute.xlu0 %817
  %821 = vset.pattern.permute.xlu0 0
  %822 = vperm.xlu0 %821, %v808
  %v823 = vpop.permute.xlu0 %822
  %826 = vset.pattern.permute.xlu0 0
  %827 = vperm.xlu0 %826, %v809
  %v828 = vpop.permute.xlu0 %827
  %v830 = vmul.f32 %v804, %v813
  %v831 = vmul.f32 %v803, %v818
  %v832 = vmul.f32 %v802, %v823
  %v833 = vmul.f32 %v805, %v828
  %v834 = vadd.f32 %v679, %v830
  %v835 = vadd.f32 %v680, %v831
  %v836 = vadd.f32 %v681, %v832
  %v837 = vadd.f32 %v682, %v833
  %v838 = vmul.f32 %v834, %v834
  %v839 = vmul.f32 %v835, %v835
  %v840 = vmul.f32 %v836, %v836
  %v841 = vmul.f32 %v837, %v837
  %v842 = vpack.c.bf16 %v839, %v838
  %v843 = vpack.c.bf16 %v841, %v840
  %844 = vmatprep.subr.bf16.mxu0 0
  %845 = vmatpush1.bf16.msra.mxu0 %v283
  %846 = vmatprep.subr.bf16.mxu0 0
  %847 = vmatpush1.bf16.msra.mxu0 %v284
  %848 = vmatprep.subr.bf16.mxu0 0
  %849 = vmatpush1.bf16.msra.mxu0 %v285
  %850 = vmatprep.subr.bf16.mxu0 0
  %851 = vmatpush1.bf16.msra.mxu0 %v286
  %852 = vmatprep.subr.bf16.mxu0 0
  %853 = vmatpush1.bf16.msra.mxu0 %v287
  %854 = vmatprep.subr.bf16.mxu0 0
  %855 = vmatpush1.bf16.msra.mxu0 %v288
  %856 = vmatprep.subr.bf16.mxu0 0
  %857 = vmatpush1.bf16.msra.mxu0 %v289
  %858 = vmatprep.subr.bf16.mxu0 0
  %859 = vmatpush1.bf16.msra.mxu0 %v290
  %860 = vmatprep.subr.bf16.mxu0 0
  %861 = vmatpush1.bf16.msra.mxu0 0
  %862 = vmatprep.subr.bf16.mxu0 0
  %863 = vmatpush1.bf16.msra.mxu0 0
  %864 = vmatprep.subr.bf16.mxu0 0
  %865 = vmatpush1.bf16.msra.mxu0 0
  %866 = vmatprep.subr.bf16.mxu0 0
  %867 = vmatpush1.bf16.msra.mxu0 0
  %868 = vmatprep.subr.bf16.mxu0 0
  %869 = vmatpush1.bf16.msra.mxu0 0
  %870 = vmatprep.subr.bf16.mxu0 0
  %871 = vmatpush1.bf16.msra.mxu0 0
  %872 = vmatprep.subr.bf16.mxu0 0
  %873 = vmatpush1.bf16.msra.mxu0 0
  %874 = vmatprep.subr.bf16.mxu0 0
  %875 = vmatpush1.bf16.msra.mxu0 0
  %876 = vmatprep.mubr.bf16.mxu0 0
  %877 = vmatmul.mubr.bf16.gmra.mrb[0].mxu0 %v842
  %v878 = vpop.f32.mrb[0].mxu0
  %v879 = vadd.f32 0.0, %v878
  %v880 = vpop.f32.mrb[0].mxu0
  %v881 = vpop.f32.mrb[0].mxu0
  %v882 = vadd.f32 0.0, %v881
  %v883 = vpop.f32.mrb[0].mxu0
  %884 = vmatprep.mubr.bf16.mxu0 0
  %885 = vmatmul.mubr.bf16.gmra.mrb[0].mxu0 %v843
  %v886 = vpop.f32.mrb[0].mxu0
  %v887 = vadd.f32 0.0, %v886
  %v888 = vpop.f32.mrb[0].mxu0
  %v889 = vpop.f32.mrb[0].mxu0
  %v890 = vadd.f32 0.0, %v889
  %v891 = vpop.f32.mrb[0].mxu0
  %892 = vdwg.mxu0
  %v893 = vmax.f32 %v879, 1e-24
  %v894 = vmax.f32 %v882, 1e-24
  %v895 = vmax.f32 %v887, 1e-24
  %v896 = vmax.f32 %v890, 1e-24
  %v897 = vrsqrt.pop %v893
  %v898 = vrsqrt.pop %v894
  %v899 = vrsqrt.pop %v895
  %v900 = vrsqrt.pop %v896
  %v901 = vmul.f32 %v834, %v897
  %v902 = vmul.f32 %v835, %v898
  %v903 = vmul.f32 %v836, %v899
  %v904 = vmul.f32 %v837, %v900
  %v905 = vld [vmem:[%s11] sm:$0x1]
  %v907 = vlaneseq
  %v908 = vshrl.u32 %v907, 7
  %v909 = vsub.s32 0, %v908
  %v910 = vrot.slane %v905, %v909
  %v912 = vmul.f32 %v901, %v910
  %v913 = vmul.f32 %v902, %v910
  %v914 = vmul.f32 %v903, %v910
  %v915 = vmul.f32 %v904, %v910
  %v916 = vxor.u32 %v912, 2147483648
  %v917 = vxor.u32 %v913, 2147483648
  %v918 = vxor.u32 %v914, 2147483648
  %v919 = vxor.u32 %v915, 2147483648
  %v920 = vmul.f32 %v916, 1.442695
  %v921 = vpow.pop %v920
  %v922 = vmul.f32 %v917, 1.442695
  %v923 = vpow.pop %v922
  %v924 = vmul.f32 %v918, 1.442695
  %v925 = vpow.pop %v924
  %v926 = vmul.f32 %v919, 1.442695
  %v927 = vpow.pop %v926
  %v928 = vadd.f32 %v921, 1.0
  %v929 = vadd.f32 %v923, 1.0
  %v930 = vadd.f32 %v925, 1.0
  %v931 = vadd.f32 %v927, 1.0
  %v932 = vrcp.pop %v928
  %v933 = vmul.f32 1.0, %v932
  %v934 = vrcp.pop %v929
  %v935 = vmul.f32 1.0, %v934
  %v936 = vrcp.pop %v930
  %v937 = vmul.f32 1.0, %v936
  %v938 = vrcp.pop %v931
  %v939 = vmul.f32 1.0, %v938
  %v940 = vmul.f32 %v912, %v933
  %v941 = vmul.f32 %v913, %v935
  %v942 = vmul.f32 %v914, %v937
  %v943 = vmul.f32 %v915, %v939
  %v944 = vld [vmem:[%s1] sm:$0xf]
  %v945 = vld [vmem:[%s1 + $0x4] sm:$0xf]
  %v946 = vld [vmem:[%s1 + $0x8] sm:$0xf]
  %v947 = vld [vmem:[%s1 + $0xc] sm:$0xf]
  %v948 = vld [vmem:[%s4] sm:$0xf]
  %v949 = vld [vmem:[%s4 + $0x4] sm:$0xf]
  %v950 = vld [vmem:[%s4 + $0x8] sm:$0xf]
  %v951 = vld [vmem:[%s4 + $0xc] sm:$0xf]
  %v952 = vld [vmem:[%s4 + $0x10] sm:$0xf]
  %v953 = vld [vmem:[%s4 + $0x14] sm:$0xf]
  %v954 = vld [vmem:[%s4 + $0x18] sm:$0xf]
  %v955 = vld [vmem:[%s4 + $0x1c] sm:$0xf]
  %v960 = vunpack.c.l.b16 %v944
  %v961 = vunpack.c.l.b16 %v945
  %v962 = vunpack.c.l.b16 %v946
  %v963 = vunpack.c.l.b16 %v947
  %v964 = vpack.c.b16 %v961, %v960
  %v965 = vpack.c.b16 %v963, %v962
  %v974 = vunpack.c.l.b16 %v948
  %v975 = vunpack.c.l.b16 %v949
  %v976 = vunpack.c.l.b16 %v950
  %v977 = vunpack.c.l.b16 %v951
  %v978 = vunpack.c.l.b16 %v952
  %v979 = vunpack.c.l.b16 %v953
  %v980 = vunpack.c.l.b16 %v954
  %v981 = vunpack.c.l.b16 %v955
  %v982 = vpack.c.b16 %v975, %v974
  %v983 = vpack.c.b16 %v977, %v976
  %v984 = vpack.c.b16 %v979, %v978
  %v985 = vpack.c.b16 %v981, %v980
  %v991 = vsel %vm173, %v964, 0
  %v994 = vsel %vm173, %v965, 0
  %996 = vmatprep.subr.bf16.mxu0 0
  %997 = vmatpush1.bf16.msra.mxu0 %v982
  %998 = vmatprep.subr.bf16.mxu0 0
  %999 = vmatpush1.bf16.msra.mxu0 %v983
  %1000 = vmatprep.subr.bf16.mxu0 0
  %1001 = vmatpush1.bf16.msra.mxu0 %v984
  %1002 = vmatprep.subr.bf16.mxu0 0
  %1003 = vmatpush1.bf16.msra.mxu0 %v985
  %1004 = vmatprep.subr.bf16.mxu0 0
  %1005 = vmatpush1.bf16.msra.mxu0 0
  %1006 = vmatprep.subr.bf16.mxu0 0
  %1007 = vmatpush1.bf16.msra.mxu0 0
  %1008 = vmatprep.subr.bf16.mxu0 0
  %1009 = vmatpush1.bf16.msra.mxu0 0
  %1010 = vmatprep.subr.bf16.mxu0 0
  %1011 = vmatpush1.bf16.msra.mxu0 0
  %1012 = vmatprep.subr.bf16.mxu0 0
  %1013 = vmatpush1.bf16.msra.mxu0 0
  %1014 = vmatprep.subr.bf16.mxu0 0
  %1015 = vmatpush1.bf16.msra.mxu0 0
  %1016 = vmatprep.subr.bf16.mxu0 0
  %1017 = vmatpush1.bf16.msra.mxu0 0
  %1018 = vmatprep.subr.bf16.mxu0 0
  %1019 = vmatpush1.bf16.msra.mxu0 0
  %1020 = vmatprep.subr.bf16.mxu0 0
  %1021 = vmatpush1.bf16.msra.mxu0 0
  %1022 = vmatprep.subr.bf16.mxu0 0
  %1023 = vmatpush1.bf16.msra.mxu0 0
  %1024 = vmatprep.subr.bf16.mxu0 0
  %1025 = vmatpush1.bf16.msra.mxu0 0
  %1026 = vmatprep.subr.bf16.mxu0 0
  %1027 = vmatpush1.bf16.msra.mxu0 0
  %1028 = vmatprep.mubr.bf16.mxu0 0
  %1029 = vmatmul.mubr.bf16.gmra.mrb[0].mxu0 %v991
  %v1030 = vpop.f32.mrb[0].mxu0
  %v1031 = vadd.f32 0.0, %v1030
  %v1032 = vpop.f32.mrb[0].mxu0
  %v1033 = vpop.f32.mrb[0].mxu0
  %v1034 = vadd.f32 0.0, %v1033
  %v1035 = vpop.f32.mrb[0].mxu0
  %1036 = vmatprep.mubr.bf16.mxu0 0
  %1037 = vmatmul.mubr.bf16.gmra.mrb[0].mxu0 %v994
  %v1038 = vpop.f32.mrb[0].mxu0
  %v1039 = vadd.f32 0.0, %v1038
  %v1040 = vpop.f32.mrb[0].mxu0
  %v1041 = vpop.f32.mrb[0].mxu0
  %v1042 = vadd.f32 0.0, %v1041
  %v1043 = vpop.f32.mrb[0].mxu0
  %1044 = vdwg.mxu0
  %v1045 = vadd.f32 %v940, %v1031
  %v1046 = vadd.f32 %v941, %v1034
  %v1047 = vadd.f32 %v942, %v1039
  %v1048 = vadd.f32 %v943, %v1042
  %v1049 = vld [vmem:[%s8] sm:$0x1]
  %v1051 = vlaneseq
  %v1052 = vshrl.u32 %v1051, 7
  %v1053 = vsub.s32 0, %v1052
  %v1054 = vrot.slane %v1049, %v1053
  %v1056 = vadd.f32 %v1045, %v1054
  %v1057 = vadd.f32 %v1046, %v1054
  %v1058 = vadd.f32 %v1047, %v1054
  %v1059 = vadd.f32 %v1048, %v1054
  %1060 = vst [vmem:[%s14] sm:$0xff] %v1056
  %1061 = vst [vmem:[%s14 + $0x8] sm:$0xff] %v1057
  %1062 = vst [vmem:[%s14 + $0x10] sm:$0xff] %v1058
  %1063 = vst [vmem:[%s14 + $0x18] sm:$0xff] %v1059
  // Predicated region
  $region58: #{_lambda_.1} parent=0 // pred_check
    _
  $region59: #{_lambda_.1} parent=0 // pred_check_branch
    %1065 = sbr.rel (0) target = $region61
  $region60: #{_lambda_.1} parent=0 // pred_region
    _
  $region61: #{_lambda_.1} parent=0 // pred_fallthru
    _
  // Predicated region
  $region62: #{_lambda_.1} parent=0 // pred_check
    _
  $region63: #{_lambda_.1} parent=0 // pred_check_branch
    %1067 = sbr.rel (0) target = $region65
  $region64: #{_lambda_.1} parent=0 // pred_region
    _
  $region65: #{_lambda_.1} parent=0 // pred_fallthru
    _

</llo_original>
